<compile_context>
chip_gen: v7x
topology: tpu7x:2x2x1
jax: 0.10.0
libtpu: 0.0.40
codegen_flags: <defaults>
</compile_context>

<pallas_src>
import functools

import numpy as np
import jax
import jax.numpy as jnp
from jax.experimental import pallas as pl
from jax.experimental.pallas import tpu as pltpu


# ------------------------------------------------------------------ target / mask kernel

def _target_mask_kernel(logit_ref, y_ref, ps_ref, nt_ref, maskT_ref):
    """Fused small (B,C) glue: class softmax, partial-label renormalization
    (new_target) and the transposed (B,B) positive-pair mask."""
    logits = logit_ref[...].astype(jnp.float32)
    y = y_ref[...].astype(jnp.float32)
    ps = ps_ref[...].astype(jnp.float32)

    # output_sm = softmax(outputs[:B], dim=1)
    m = jnp.max(logits, axis=1, keepdims=True)
    e = jnp.exp(logits - m)
    sm = e / jnp.sum(e, axis=1, keepdims=True)

    # new_target = (Y * sm) / row-sum  (revisedY)
    rev = y * sm
    nt_ref[...] = rev / jnp.sum(rev, axis=1, keepdims=True)

    # target_predict = argmax(sm * Y, dim=1)  (first index on ties, like torch)
    B, C = y.shape
    v = sm * y
    col = jax.lax.broadcasted_iota(jnp.int32, (B, C), 1).astype(jnp.float32)
    row_max = jnp.max(v, axis=1, keepdims=True)
    tp = jnp.min(jnp.where(v == row_max, col, float(C)), axis=1, keepdims=True)  # (B,1)
    onehot = (col == tp).astype(jnp.float32)                                      # (B,C)
    counts = jnp.sum(onehot, axis=0, keepdims=True)                               # (1,C)
    # mask_B[i, j] = Y[i, tp[j]] * ps[i, tp[j]] / counts[tp[j]]
    # counts[tp[j]] >= 1 always; classes with counts == 0 have an all-zero onehot column,
    # so clamping the denominator to 1 reproduces the reference's `if tmp.sum() > 0` guard
    # without producing 0 * inf NaNs in the matmul below.
    w = y * ps / jnp.maximum(counts, 1.0)                                         # (B,C)
    # Emit the transpose directly: mask_B_T[j, i] = sum_c onehot[j, c] * w[i, c].
    maskT_ref[...] = jax.lax.dot_general(
        onehot, w, (((1,), (1,)), ((), ())),
        precision=jax.lax.Precision.HIGHEST,
        preferred_element_type=jnp.float32)


# ------------------------------------------------------------------------- loss kernel

def _loss_kernel(k_ref, q_ref, mT_ref, o_ref, m_sc, l_sc, sa_sc, sw_sc,
                 *, inv_temp, scale, tq, tk):
    """Tiled contrastive-loss hot path with online (flash-style) log-sum-exp.

    Tile orientation is transposed: s[t, u] = <contrast[t], anchor[u]> / T, shape
    (TK, TQ), so all per-anchor running statistics are lane-dense (1, TQ) rows and the
    final store is lane-dense as well."""
    qi = pl.program_id(0)
    ki = pl.program_id(1)

    @pl.when(ki == 0)
    def _init():
        m_sc[...] = jnp.full((1, tq), -jnp.inf, jnp.float32)
        l_sc[...] = jnp.zeros((1, tq), jnp.float32)
        sa_sc[...] = jnp.zeros((1, tq), jnp.float32)
        sw_sc[...] = jnp.zeros((1, tq), jnp.float32)

    # MXU: contract last dims of (TK, D) x (TQ, D) -> (TK, TQ); bf16 in, f32 accumulate.
    s = jax.lax.dot_general(
        k_ref[...].astype(jnp.bfloat16), q_ref[...].astype(jnp.bfloat16),
        (((1,), (1,)), ((), ())),
        preferred_element_type=jnp.float32) * inv_temp

    # Self-contrast mask (global diagonal), built in-register per tile:
    # global_k == global_q  <=>  (t - u) == qi*tq - ki*tk.
    not_self = (jax.lax.broadcasted_iota(jnp.int32, (tk, tq), 0)
                - jax.lax.broadcasted_iota(jnp.int32, (tk, tq), 1)) != (qi * tq - ki * tk)

    # Online log-sum-exp over the contrast (sublane) axis, per anchor (lane).
    m_prev = m_sc[...]
    m_new = jnp.maximum(m_prev, jnp.max(s, axis=0, keepdims=True))
    p = jnp.where(not_self, jnp.exp(s - m_new), 0.0)
    l_sc[...] = l_sc[...] * jnp.exp(m_prev - m_new) + jnp.sum(p, axis=0, keepdims=True)
    m_sc[...] = m_new

    # Positive-pair accumulators: sum(mask * a) and sum(mask) per anchor.
    mt = mT_ref[...] * not_self.astype(jnp.float32)
    sa_sc[...] += jnp.sum(mt * s, axis=0, keepdims=True)
    sw_sc[...] += jnp.sum(mt, axis=0, keepdims=True)

    @pl.when(ki == pl.num_programs(1) - 1)
    def _finalize():
        # log sum_{k != i} exp(a_ik); mean_log_prob_pos = sum(mask*a) - lse * sum(mask)
        lse = m_sc[...] + jnp.log(l_sc[...])
        mlpp = sa_sc[...] - lse * sw_sc[...]
        o_ref[...] = ((-scale) * mlpp)[None]          # (1, 1, TQ), lane-dense store


# ------------------------------------------------------------------------------ wrapper

def _pick_tile(b):
    """Largest tile dividing the per-view batch that keeps all BlockSpecs legal."""
    for t in (512, 256, 128):
        if b % t == 0:
            return t
    return b


def con_loss_forward(outputs, features, Y, predicted_score, *,
                     batch_size, temperature, num_class, base_temperature=0.07):
    B = int(batch_size)
    C = int(num_class)
    V = int(features.shape[1])
    D = int(features.shape[2])
    CB = V * B

    Y = Y.astype(jnp.float32)
    ps = predicted_score.astype(jnp.float32)
    outputs_b = outputs[:B, :].astype(jnp.float32)

    # ---- fused softmax / revisedY / transposed positive mask (grid-less, tiny) --------
    new_target, mask_B_T = pl.pallas_call(
        _target_mask_kernel,
        out_shape=(jax.ShapeDtypeStruct((B, C), jnp.float32),
                   jax.ShapeDtypeStruct((B, B), jnp.float32)),
    )(outputs_b, Y, ps)

    # ---- tiling -------------------------------------------------------------------------
    tq = _pick_tile(B)
    tk = tq
    assert tq % 8 == 0, "con_loss_forward: batch_size must be a multiple of 8"
    # bf16 features need 16-sublane tiles; fall back to f32 storage otherwise
    # (the kernel still casts to bf16 right before the MXU).
    feat_dtype = jnp.bfloat16 if tq % 16 == 0 else jnp.float32

    # contrast_feature = cat(unbind(features, 1), 0) -> (V*B, D); single fused
    # transpose+cast streaming pass in XLA (no O(CB^2) mask tiling anymore).
    # TODO(synk): fold this view-concat into the feature index_map to save one B*V*D pass.
    cf = jnp.transpose(features, (1, 0, 2)).reshape(CB, D).astype(feat_dtype)

    nq, nk = CB // tq, CB // tk
    qb, kb = B // tq, B // tk            # mask_B blocks along anchor / contrast axes

    kernel = functools.partial(
        _loss_kernel,
        inv_temp=float(1.0 / temperature),
        scale=float(temperature / base_temperature),
        tq=tq, tk=tk)

    # rough VMEM budget (double-buffered inputs + scratch) with headroom, capped for v7x
    fbytes = 2 if feat_dtype == jnp.bfloat16 else 4
    vmem_need = 2 * ((tq + tk) * D * fbytes + tk * tq * 4) + 5 * tq * 4
    vmem_limit = int(min(48 * 1024 * 1024, max(4 * vmem_need, 8 * 1024 * 1024)))

    per_anchor = pl.pallas_call(
        kernel,
        grid=(nq, nk),
        in_specs=[
            pl.BlockSpec((tk, D), lambda qi, ki: (ki, 0)),               # contrast rows
            pl.BlockSpec((tq, D), lambda qi, ki: (qi, 0)),               # anchor rows (resident over ki)
            pl.BlockSpec((tk, tq), lambda qi, ki: (ki % kb, qi % qb)),   # mask_B^T sub-tile
        ],
        out_specs=pl.BlockSpec((1, 1, tq), lambda qi, ki: (qi, 0, 0)),
        out_shape=jax.ShapeDtypeStruct((nq, 1, tq), jnp.float32),
        scratch_shapes=[pltpu.VMEM((1, tq), jnp.float32)] * 4,
        compiler_params=pltpu.CompilerParams(
            dimension_semantics=("parallel", "arbitrary"),
            vmem_limit_bytes=vmem_limit),
    )(cf, cf, mask_B_T)

    loss_con = jnp.mean(per_anchor)      # == loss_con_m.view(V, B).mean()
    return loss_con, new_target


# ---------------------------------------------------------------------------- reference

def _reference_numpy(outputs, features, Y, ps, temperature, base_temperature, B, C):
    """Direct numpy transcription of the PyTorch forward (for validation).
    Features are rounded to bf16 to match the kernel's MXU input dtype."""
    outputs = np.asarray(outputs, np.float32)
    features = np.asarray(jnp.asarray(features).astype(jnp.bfloat16).astype(jnp.float32))
    Y = np.asarray(Y, np.float32)
    ps = np.asarray(ps, np.float32)
    V = features.shape[1]
    cf = np.concatenate([features[:, v, :] for v in range(V)], axis=0)
    adc = (cf @ cf.T) / temperature
    lm = adc.max(axis=1, keepdims=True)
    logits = adc - lm
    ex = np.exp(outputs[:B] - outputs[:B].max(axis=1, keepdims=True))
    sm = ex / ex.sum(axis=1, keepdims=True)
    tp = np.argmax(sm * Y, axis=1)
    mask = np.zeros((B, B), np.float32)
    ones = np.ones(B, np.float32)
    zeros = np.zeros(B, np.float32)
    for i in range(B):
        for c in range(C):
            if Y[i, c] == 1.0:
                tmp = np.where(tp == c, ones, zeros)
                if tmp.sum() > 0:
                    tmp = tmp / tmp.sum()
                    mask[i] = mask[i] + tmp * ps[i, c]
    mask = np.tile(mask, (V, V))
    CB = V * B
    logits_mask = np.ones((CB, CB), np.float32)
    np.fill_diagonal(logits_mask, 0.0)
    mask = mask * logits_mask
    exp_logits = logits_mask * np.exp(logits)
    log_prob = logits - np.log(exp_logits.sum(axis=1, keepdims=True))
    mlpp = (mask * log_prob).sum(axis=1)
    loss = (-(temperature / base_temperature) * mlpp).reshape(V, B).mean()
    rev = Y * sm
    new_target = rev / rev.sum(axis=1, keepdims=True)
    return loss, new_target


# --------------------------------------------------------------------------------- main

if __name__ == "__main__":
    B, C, V, D = 16, 10, 2, 32
    temperature = 0.5
    base_temperature = 0.07

    key = jax.random.PRNGKey(0)
    k1, k2, k3, k4, k5 = jax.random.split(key, 5)

    feats = jax.random.normal(k1, (B, V, D), jnp.float32)
    feats = feats / jnp.linalg.norm(feats, axis=-1, keepdims=True)
    outputs = jax.random.normal(k2, (B, C), jnp.float32)
    true_labels = jax.random.randint(k3, (B,), 0, C)
    Y = (jax.random.uniform(k4, (B, C)) < 0.3).astype(jnp.float32)
    Y = Y.at[jnp.arange(B), true_labels].set(1.0)      # every row has >=1 candidate label
    predicted_score = jax.random.uniform(k5, (B, C), jnp.float32)
    predicted_score = predicted_score / jnp.sum(predicted_score, axis=1, keepdims=True)

    loss, new_target = con_loss_forward(
        outputs, feats, Y, predicted_score,
        batch_size=B, temperature=temperature, num_class=C,
        base_temperature=base_temperature)
    loss = jax.block_until_ready(loss)
    new_target = jax.block_until_ready(new_target)

    ref_loss, ref_new_target = _reference_numpy(
        outputs, feats, Y, predicted_score, temperature, base_temperature, B, C)

    assert np.allclose(np.asarray(loss), ref_loss, rtol=2e-3, atol=2e-3), \
        (float(loss), float(ref_loss))
    assert np.allclose(np.asarray(new_target), ref_new_target, rtol=1e-4, atol=1e-4)

    print("KERNEL_OK")
</pallas_src>

<mosaic_0001>
module attributes {stable_mosaic.version = 11 : i64} {
  func.func @_target_mask_kernel(%arg0: memref<16x10xf32, #tpu.memory_space<vmem>>, %arg1: memref<16x10xf32, #tpu.memory_space<vmem>>, %arg2: memref<16x10xf32, #tpu.memory_space<vmem>>, %arg3: memref<16x10xf32, #tpu.memory_space<vmem>>, %arg4: memref<16x16xf32, #tpu.memory_space<vmem>>) attributes {dimension_semantics = [], scalar_prefetch = 0 : i64, scratch_operands = 0 : i64, tpu.core_type = #tpu.core_type<tc>} {
    %c0 = arith.constant 0 : index
    %c0_0 = arith.constant 0 : index
    %0 = vector.load %arg0[%c0, %c0_0] : memref<16x10xf32, #tpu.memory_space<vmem>>, vector<16x10xf32>
    %c0_1 = arith.constant 0 : index
    %c0_2 = arith.constant 0 : index
    %1 = vector.load %arg1[%c0_1, %c0_2] : memref<16x10xf32, #tpu.memory_space<vmem>>, vector<16x10xf32>
    %c0_3 = arith.constant 0 : index
    %c0_4 = arith.constant 0 : index
    %2 = vector.load %arg2[%c0_3, %c0_4] : memref<16x10xf32, #tpu.memory_space<vmem>>, vector<16x10xf32>
    %cst = arith.constant dense<0xFF800000> : vector<16xf32>
    %3 = vector.multi_reduction <maximumf>, %0, %cst [1] : vector<16x10xf32> to vector<16xf32>
    %4 = vector.shape_cast %3 : vector<16xf32> to vector<16x1xf32>
    %5 = vector.broadcast %4 : vector<16x1xf32> to vector<16x10xf32>
    %6 = arith.subf %0, %5 : vector<16x10xf32>
    %7 = math.exp %6 : vector<16x10xf32>
    %cst_5 = arith.constant dense<0.000000e+00> : vector<16xf32>
    %8 = vector.multi_reduction <add>, %7, %cst_5 [1] : vector<16x10xf32> to vector<16xf32>
    %9 = vector.shape_cast %8 : vector<16xf32> to vector<16x1xf32>
    %10 = vector.broadcast %9 : vector<16x1xf32> to vector<16x10xf32>
    %11 = arith.divf %7, %10 : vector<16x10xf32>
    %12 = arith.mulf %1, %11 : vector<16x10xf32>
    %cst_6 = arith.constant dense<0.000000e+00> : vector<16xf32>
    %13 = vector.multi_reduction <add>, %12, %cst_6 [1] : vector<16x10xf32> to vector<16xf32>
    %14 = vector.shape_cast %13 : vector<16xf32> to vector<16x1xf32>
    %15 = vector.broadcast %14 : vector<16x1xf32> to vector<16x10xf32>
    %16 = arith.divf %12, %15 : vector<16x10xf32>
    %c0_7 = arith.constant 0 : index
    %c0_8 = arith.constant 0 : index
    %17 = vector.load %arg3[%c0_7, %c0_8] : memref<16x10xf32, #tpu.memory_space<vmem>>, vector<16x10xf32>
    tpu.vector_store %arg3[%c0_7, %c0_8], %16 {strides = array<i32>} : memref<16x10xf32, #tpu.memory_space<vmem>>, vector<16x10xf32>,
    %18 = arith.mulf %11, %1 : vector<16x10xf32>
    %19 = tpu.iota {dimensions = array<i32: 1>} : vector<16x10xi32>
    %20 = arith.sitofp %19 : vector<16x10xi32> to vector<16x10xf32>
    %cst_9 = arith.constant dense<0xFF800000> : vector<16xf32>
    %21 = vector.multi_reduction <maximumf>, %18, %cst_9 [1] : vector<16x10xf32> to vector<16xf32>
    %22 = vector.shape_cast %21 : vector<16xf32> to vector<16x1xf32>
    %23 = vector.broadcast %22 : vector<16x1xf32> to vector<16x10xf32>
    %24 = arith.cmpf oeq, %18, %23 : vector<16x10xf32>
    %cst_10 = arith.constant 1.000000e+01 : f32
    %25 = vector.broadcast %cst_10 : f32 to vector<16x10xf32>
    %26 = arith.select %24, %20, %25 : vector<16x10xi1>, vector<16x10xf32>
    %cst_11 = arith.constant dense<0x7F800000> : vector<16xf32>
    %27 = vector.multi_reduction <minimumf>, %26, %cst_11 [1] : vector<16x10xf32> to vector<16xf32>
    %28 = vector.shape_cast %27 : vector<16xf32> to vector<16x1xf32>
    %29 = vector.broadcast %28 : vector<16x1xf32> to vector<16x10xf32>
    %30 = arith.cmpf oeq, %20, %29 : vector<16x10xf32>
    %31 = arith.extui %30 : vector<16x10xi1> to vector<16x10xi32>
    %32 = arith.sitofp %31 : vector<16x10xi32> to vector<16x10xf32>
    %cst_12 = arith.constant dense<0.000000e+00> : vector<10xf32>
    %33 = vector.multi_reduction <add>, %32, %cst_12 [0] : vector<16x10xf32> to vector<10xf32>
    %34 = vector.shape_cast %33 : vector<10xf32> to vector<1x10xf32>
    %35 = arith.mulf %1, %2 : vector<16x10xf32>
    %cst_13 = arith.constant 1.000000e+00 : f32
    %36 = vector.broadcast %cst_13 : f32 to vector<1x10xf32>
    %37 = arith.maximumf %34, %36 : vector<1x10xf32>
    %38 = vector.broadcast %37 : vector<1x10xf32> to vector<16x10xf32>
    %39 = arith.divf %35, %38 : vector<16x10xf32>
    %cst_14 = arith.constant dense<0.000000e+00> : vector<16x16xf32>
    %40 = tpu.matmul %32, %39, %cst_14 {dimension_numbers = #tpu.dot_dimension_numbers<[1], [1], [0], [0], [0, 0, 1, 0], [], []>, precision = #tpu.contract_precision<fp32>} : vector<16x10xf32>, vector<16x10xf32>, vector<16x16xf32> -> vector<16x16xf32>
    %c0_15 = arith.constant 0 : index
    %c0_16 = arith.constant 0 : index
    %41 = vector.load %arg4[%c0_15, %c0_16] : memref<16x16xf32, #tpu.memory_space<vmem>>, vector<16x16xf32>
    tpu.vector_store %arg4[%c0_15, %c0_16], %40 {strides = array<i32>} : memref<16x16xf32, #tpu.memory_space<vmem>>, vector<16x16xf32>,
    return
  }
}

</mosaic_0001>

<llo_original>
// kernel: tpu_custom_call.1
$region0: #{tpu_custom_call.1}
  #allocation0 [shape = 'u32[]', space=smem, size = 0x4, offset = 0x4, fixed_abs, tag = 'smem constant byte address 0x4 - core index']
  #allocation1 [shape = 'u32[144,128]{1,0:T(1,128)}', space=vmem, size = 0x12000, scoped, tag = 'internal scratch']
  %s0 = inlined_call_operand.hbm [shape: f32[16,10], index: 0, kind: input, shape index: {}]
  %s1 = inlined_call_operand.hbm [shape: f32[16,10], index: 1, kind: input, shape index: {}]
  %s2 = inlined_call_operand.hbm [shape: f32[16,10], index: 2, kind: input, shape index: {}]
  %s3 = inlined_call_operand.hbm [shape: f32[16,10], index: 3, kind: output, shape index: {0}]
  %s4 = inlined_call_operand.hbm [shape: f32[16,16], index: 4, kind: output, shape index: {1}]
  %5 = xla_tuple %s3, %s4
  %s6 = sld [smem:[#allocation0]]
  $region42: #{tpu_custom_call.1} parent=0
    _
  %s8 = ssub.s32 1, %s6
  %s9 = scalar_select 0, %s8, %s6
  $region1: #{tpu_custom_call.1} parent=0
    #allocation2 [shape = 'u8[8192]{0}', space=vmem, size = 0x2000, scoped, tag = 'input window, operand 0, single buffered']
    #allocation3 [shape = 's32[1]{0}', space=sflag, size = 0x4, scoped, tag = 'scoped memory for tpu_custom_call.1']
    #allocation4 [shape = 's32[1]{0}', space=sflag, size = 0x4, scoped, tag = 'scoped memory for tpu_custom_call.1']
    #allocation5 [shape = 'u8[8192]{0}', space=vmem, size = 0x2000, scoped, tag = 'input window, operand 1, single buffered']
    #allocation6 [shape = 's32[1]{0}', space=sflag, size = 0x4, scoped, tag = 'scoped memory for tpu_custom_call.1']
    #allocation7 [shape = 'u8[8192]{0}', space=vmem, size = 0x2000, scoped, tag = 'input window, operand 2, single buffered']
    #allocation8 [shape = 'u8[8192]{0}', space=vmem, size = 0x2000, scoped, tag = 'output window, operand 0, single buffered']
    #allocation9 [shape = 'u8[8192]{0}', space=vmem, size = 0x2000, scoped, tag = 'output window, operand 1, single buffered']
    #allocation10 [shape = 's32[1]{0}', space=sflag, size = 0x4, scoped, tag = 'scoped memory for tpu_custom_call.1']
    %10 = vsyncpa [#allocation3], 0
    %11 = vsyncpa [#allocation6], 0
    %12 = vsyncpa [#allocation4], 0
    %13 = vsyncpa [#allocation10], 0
    // Predicated region
    $region2: #{tpu_custom_call.1} parent=1 // pred_check
      _
    $region3: #{tpu_custom_call.1} parent=1 // pred_check_branch
      %15 = sbr.rel (0) target = $region5
    $region4: #{tpu_custom_call.1} parent=1 // pred_region
      %s17 = ssub.s32 256, 256
      %18 = vsyncadd [#allocation3], %s17
      %s19 = sshll.u32 [#allocation2], 4
      %s20 = int_to_ptr.vmem [resolvable:$true] %s19
      %25 = dma.hbm_to_vmem [thread:$0]  %s0, 256, %s20, [#allocation3], 128, 128, 8
    $region5: #{tpu_custom_call.1} parent=1 // pred_fallthru
      _
    // Predicated region
    $region6: #{tpu_custom_call.1} parent=1 // pred_check
      _
    $region7: #{tpu_custom_call.1} parent=1 // pred_check_branch
      %27 = sbr.rel (0) target = $region9
    $region8: #{tpu_custom_call.1} parent=1 // pred_region
      %s29 = ssub.s32 256, 256
      %30 = vsyncadd [#allocation6], %s29
      %s31 = sshll.u32 [#allocation5], 4
      %s32 = int_to_ptr.vmem [resolvable:$true] %s31
      %37 = dma.hbm_to_vmem [thread:$0]  %s1, 256, %s32, [#allocation6], 128, 128, 8
    $region9: #{tpu_custom_call.1} parent=1 // pred_fallthru
      _
    // Predicated region
    $region10: #{tpu_custom_call.1} parent=1 // pred_check
      _
    $region11: #{tpu_custom_call.1} parent=1 // pred_check_branch
      %39 = sbr.rel (0) target = $region13
    $region12: #{tpu_custom_call.1} parent=1 // pred_region
      %s41 = ssub.s32 256, 256
      %42 = vsyncadd [#allocation6], %s41
      %s43 = sshll.u32 [#allocation7], 4
      %s44 = int_to_ptr.vmem [resolvable:$true] %s43
      %49 = dma.hbm_to_vmem [thread:$0]  %s2, 256, %s44, [#allocation6], 128, 128, 8
    $region13: #{tpu_custom_call.1} parent=1 // pred_fallthru
      _
    // Predicated region
    $region14: #{tpu_custom_call.1} parent=1 // pred_check
      _
    $region15: #{tpu_custom_call.1} parent=1 // pred_check_branch
      %51 = sbr.rel (0) target = $region17
    $region16: #{tpu_custom_call.1} parent=1 // pred_region
      %52 = dma.done [#allocation3], 256
    $region17: #{tpu_custom_call.1} parent=1 // pred_fallthru
      _
    // Predicated region
    $region18: #{tpu_custom_call.1} parent=1 // pred_check
      _
    $region19: #{tpu_custom_call.1} parent=1 // pred_check_branch
      %54 = sbr.rel (0) target = $region21
    $region20: #{tpu_custom_call.1} parent=1 // pred_region
      %55 = dma.done [#allocation6], 256
    $region21: #{tpu_custom_call.1} parent=1 // pred_fallthru
      _
    // Predicated region
    $region22: #{tpu_custom_call.1} parent=1 // pred_check
      _
    $region23: #{tpu_custom_call.1} parent=1 // pred_check_branch
      %57 = sbr.rel (0) target = $region25
    $region24: #{tpu_custom_call.1} parent=1 // pred_region
      %58 = dma.done [#allocation6], 256
    $region25: #{tpu_custom_call.1} parent=1 // pred_fallthru
      _
    %v59 = vld [vmem:[#allocation2] sm:$0xff]
    %v60 = vld [vmem:[#allocation2 + $0x8] sm:$0xff]
    %v61 = vld [vmem:[#allocation5] sm:$0xff]
    %v62 = vld [vmem:[#allocation5 + $0x8] sm:$0xff]
    %v63 = vld [vmem:[#allocation7] sm:$0xff]
    %v64 = vld [vmem:[#allocation7 + $0x8] sm:$0xff]
    %vm65 = vcmask 80896
    %v66 = vsel %vm65, %v59, -inf
    %67 = vmax.xlane.f32.xlu0 %v66
    %v68 = vpop.xlane.xlu0 %67
    %v69 = vsel %vm65, %v60, -inf
    %70 = vmax.xlane.f32.xlu0 %v69
    %v71 = vpop.xlane.xlu0 %70
    %v72 = vsub.f32 %v59, %v68
    %v73 = vsub.f32 %v60, %v71
    %v74 = vmul.f32 %v72, 1.442695
    %v75 = vpow.pop %v74
    %v76 = vmul.f32 %v73, 1.442695
    %v77 = vpow.pop %v76
    %v78 = vsel %vm65, %v75, 0.0
    %79 = vadd.xlane.f32.xlu0 %v78
    %v80 = vpop.xlane.xlu0 %79
    %v81 = vsel %vm65, %v77, 0.0
    %82 = vadd.xlane.f32.xlu0 %v81
    %v83 = vpop.xlane.xlu0 %82
    %v84 = vrcp.pop %v80
    %v85 = vmul.f32 %v75, %v84
    %v86 = vrcp.pop %v83
    %v87 = vmul.f32 %v77, %v86
    %v88 = vmul.f32 %v61, %v85
    %v89 = vmul.f32 %v62, %v87
    %v90 = vsel %vm65, %v88, 0.0
    %91 = vadd.xlane.f32.xlu0 %v90
    %v92 = vpop.xlane.xlu0 %91
    %v93 = vsel %vm65, %v89, 0.0
    %94 = vadd.xlane.f32.xlu0 %v93
    %v95 = vpop.xlane.xlu0 %94
    %v96 = vrcp.pop %v92
    %v97 = vmul.f32 %v88, %v96
    %v98 = vrcp.pop %v95
    %v99 = vmul.f32 %v89, %v98
    %100 = vst.msk [vmem:[#allocation8] sm:$0xff] %vm65, %v97
    %101 = vst.msk [vmem:[#allocation8 + $0x8] sm:$0xff] %vm65, %v99
    %v102 = vlaneseq
    %v103 = vand.u32 %v102, 127
    %v104 = vcvt.s32.f32 %v103
    %v105 = vsel %vm65, %v88, -inf
    %106 = vmax.xlane.f32.xlu0 %v105
    %v107 = vpop.xlane.xlu0 %106
    %v108 = vsel %vm65, %v89, -inf
    %109 = vmax.xlane.f32.xlu0 %v108
    %v110 = vpop.xlane.xlu0 %109
    %vm111 = vcmp.eq.f32.partialorder %v88, %v107
    %vm112 = vcmp.eq.f32.partialorder %v89, %v110
    %v113 = vsel %vm111, %v104, 10.0
    %v114 = vsel %vm112, %v104, 10.0
    %v115 = vsel %vm65, %v113, inf
    %116 = vmin.xlane.f32.xlu0 %v115
    %v117 = vpop.xlane.xlu0 %116
    %v118 = vsel %vm65, %v114, inf
    %119 = vmin.xlane.f32.xlu0 %v118
    %v120 = vpop.xlane.xlu0 %119
    %vm121 = vcmp.eq.f32.partialorder %v104, %v117
    %vm122 = vcmp.eq.f32.partialorder %v104, %v120
    %v123 = vsel %vm121, 1, 0
    %v124 = vsel %vm122, 1, 0
    %v125 = vcvt.s32.f32 %v123
    %v126 = vcvt.s32.f32 %v124
    %v127 = vsel %vm65, %v125, 0.0
    %v128 = vsel %vm65, %v126, 0.0
    %v129 = vadd.f32 %v127, %v128
    %v130 = vrot.slane %v129, 4
    %v131 = vadd.f32 %v129, %v130
    %v132 = vrot.slane %v131, 2
    %v133 = vadd.f32 %v131, %v132
    %v134 = vrot.slane %v133, 1
    %v135 = vadd.f32 %v133, %v134
    %v136 = vmul.f32 %v61, %v63
    %v137 = vmul.f32 %v62, %v64
    %v138 = vmax.f32 %v135, 1.0
    %v139 = vrcp.pop %v138
    %v140 = vmul.f32 %v136, %v139
    %v141 = vmul.f32 %v137, %v139
    %v143 = vsel %vm65, %v125, 0
    %v146 = vsel %vm65, %v126, 0
    %v149 = vsel %vm65, %v140, 0
    %v152 = vsel %vm65, %v141, 0
    %154 = vmatprep.subr.mxu0 0.0
    %v155 = vand.u32 %v149, 4294901760
    %156 = vmatpush1.xpose.msra.mxu0 %v155
    %157 = vmatprep.subr.mxu0 0.0
    %v158 = vand.u32 %v152, 4294901760
    %159 = vmatpush1.xpose.msra.mxu0 %v158
    %160 = vmatprep.subr.mxu0 0.0
    %161 = vmatpush1.xpose.msra.mxu0 0.0
    %162 = vmatprep.subr.mxu0 0.0
    %163 = vmatpush1.xpose.msra.mxu0 0.0
    %164 = vmatprep.subr.mxu0 0.0
    %165 = vmatpush1.xpose.msra.mxu0 0.0
    %166 = vmatprep.subr.mxu0 0.0
    %167 = vmatpush1.xpose.msra.mxu0 0.0
    %168 = vmatprep.subr.mxu0 0.0
    %169 = vmatpush1.xpose.msra.mxu0 0.0
    %170 = vmatprep.subr.mxu0 0.0
    %171 = vmatpush1.xpose.msra.mxu0 0.0
    %172 = vmatprep.subr.mxu0 0.0
    %173 = vmatpush1.xpose.msra.mxu0 0.0
    %174 = vmatprep.subr.mxu0 0.0
    %175 = vmatpush1.xpose.msra.mxu0 0.0
    %176 = vmatprep.subr.mxu0 0.0
    %177 = vmatpush1.xpose.msra.mxu0 0.0
    %178 = vmatprep.subr.mxu0 0.0
    %179 = vmatpush1.xpose.msra.mxu0 0.0
    %180 = vmatprep.subr.mxu0 0.0
    %181 = vmatpush1.xpose.msra.mxu0 0.0
    %182 = vmatprep.subr.mxu0 0.0
    %183 = vmatpush1.xpose.msra.mxu0 0.0
    %184 = vmatprep.subr.mxu0 0.0
    %185 = vmatpush1.xpose.msra.mxu0 0.0
    %186 = vmatprep.subr.mxu0 0.0
    %187 = vmatpush1.xpose.msra.mxu0 0.0
    %188 = vmatprep.subr.mxu0 0.0
    %189 = vmatpush1.xpose.msra.mxu0 0.0
    %190 = vmatprep.subr.mxu0 0.0
    %191 = vmatpush1.xpose.msra.mxu0 0.0
    %192 = vmatprep.subr.mxu0 0.0
    %193 = vmatpush1.xpose.msra.mxu0 0.0
    %194 = vmatprep.subr.mxu0 0.0
    %195 = vmatpush1.xpose.msra.mxu0 0.0
    %196 = vmatprep.subr.mxu0 0.0
    %197 = vmatpush1.xpose.msra.mxu0 0.0
    %198 = vmatprep.subr.mxu0 0.0
    %199 = vmatpush1.xpose.msra.mxu0 0.0
    %200 = vmatprep.subr.mxu0 0.0
    %201 = vmatpush1.xpose.msra.mxu0 0.0
    %202 = vmatprep.subr.mxu0 0.0
    %203 = vmatpush1.xpose.msra.mxu0 0.0
    %204 = vmatprep.subr.mxu0 0.0
    %205 = vmatpush1.xpose.msra.mxu0 0.0
    %206 = vmatprep.subr.mxu0 0.0
    %207 = vmatpush1.xpose.msra.mxu0 0.0
    %208 = vmatprep.subr.mxu0 0.0
    %209 = vmatpush1.xpose.msra.mxu0 0.0
    %210 = vmatprep.subr.mxu0 0.0
    %211 = vmatpush1.xpose.msra.mxu0 0.0
    %212 = vmatprep.subr.mxu0 0.0
    %213 = vmatpush1.xpose.msra.mxu0 0.0
    %214 = vmatprep.subr.mxu0 0.0
    %215 = vmatpush1.xpose.msra.mxu0 0.0
    %216 = vmatprep.subr.mxu0 0.0
    %217 = vmatpush1.xpose.msra.mxu0 0.0
    %218 = vmatprep.subr.mxu0 0.0
    %219 = vmatpush1.xpose.msra.mxu0 0.0
    %220 = vmatprep.mubr.f32.mxu0 0.0
    %v221 = vand.u32 %v143, 4294901760
    %v222 = vsub.f32 %v143, %v221
    %v223 = vand.u32 %v222, 4294901760
    %v224 = vsub.f32 %v222, %v223
    %v225 = vand.u32 %v224, 4294901760
    %226 = vmatmul.mubr.f32.gmra.mrb[0].mxu0 %v225
    %v227 = vpop.f32.mrb[0].mxu0
    %v228 = vadd.f32 0.0, %v227
    %v229 = vpop.f32.mrb[0].mxu0
    %230 = vmatprep.mubr.f32.mxu0 0.0
    %v231 = vand.u32 %v146, 4294901760
    %v232 = vsub.f32 %v146, %v231
    %v233 = vand.u32 %v232, 4294901760
    %v234 = vsub.f32 %v232, %v233
    %v235 = vand.u32 %v234, 4294901760
    %236 = vmatmul.mubr.f32.gmra.mrb[0].mxu0 %v235
    %v237 = vpop.f32.mrb[0].mxu0
    %v238 = vadd.f32 0.0, %v237
    %v239 = vpop.f32.mrb[0].mxu0
    %240 = vdwg.mxu0
    %241 = vmatprep.subr.mxu0 0.0
    %v242 = vand.u32 %v149, 4294901760
    %v243 = vsub.f32 %v149, %v242
    %v244 = vand.u32 %v243, 4294901760
    %v245 = vsub.f32 %v243, %v244
    %v246 = vand.u32 %v245, 4294901760
    %247 = vmatpush1.xpose.msra.mxu0 %v246
    %248 = vmatprep.subr.mxu0 0.0
    %v249 = vand.u32 %v152, 4294901760
    %v250 = vsub.f32 %v152, %v249
    %v251 = vand.u32 %v250, 4294901760
    %v252 = vsub.f32 %v250, %v251
    %v253 = vand.u32 %v252, 4294901760
    %254 = vmatpush1.xpose.msra.mxu0 %v253
    %255 = vmatprep.subr.mxu0 0.0
    %256 = vmatpush1.xpose.msra.mxu0 0.0
    %257 = vmatprep.subr.mxu0 0.0
    %258 = vmatpush1.xpose.msra.mxu0 0.0
    %259 = vmatprep.subr.mxu0 0.0
    %260 = vmatpush1.xpose.msra.mxu0 0.0
    %261 = vmatprep.subr.mxu0 0.0
    %262 = vmatpush1.xpose.msra.mxu0 0.0
    %263 = vmatprep.subr.mxu0 0.0
    %264 = vmatpush1.xpose.msra.mxu0 0.0
    %265 = vmatprep.subr.mxu0 0.0
    %266 = vmatpush1.xpose.msra.mxu0 0.0
    %267 = vmatprep.subr.mxu0 0.0
    %268 = vmatpush1.xpose.msra.mxu0 0.0
    %269 = vmatprep.subr.mxu0 0.0
    %270 = vmatpush1.xpose.msra.mxu0 0.0
    %271 = vmatprep.subr.mxu0 0.0
    %272 = vmatpush1.xpose.msra.mxu0 0.0
    %273 = vmatprep.subr.mxu0 0.0
    %274 = vmatpush1.xpose.msra.mxu0 0.0
    %275 = vmatprep.subr.mxu0 0.0
    %276 = vmatpush1.xpose.msra.mxu0 0.0
    %277 = vmatprep.subr.mxu0 0.0
    %278 = vmatpush1.xpose.msra.mxu0 0.0
    %279 = vmatprep.subr.mxu0 0.0
    %280 = vmatpush1.xpose.msra.mxu0 0.0
    %281 = vmatprep.subr.mxu0 0.0
    %282 = vmatpush1.xpose.msra.mxu0 0.0
    %283 = vmatprep.subr.mxu0 0.0
    %284 = vmatpush1.xpose.msra.mxu0 0.0
    %285 = vmatprep.subr.mxu0 0.0
    %286 = vmatpush1.xpose.msra.mxu0 0.0
    %287 = vmatprep.subr.mxu0 0.0
    %288 = vmatpush1.xpose.msra.mxu0 0.0
    %289 = vmatprep.subr.mxu0 0.0
    %290 = vmatpush1.xpose.msra.mxu0 0.0
    %291 = vmatprep.subr.mxu0 0.0
    %292 = vmatpush1.xpose.msra.mxu0 0.0
    %293 = vmatprep.subr.mxu0 0.0
    %294 = vmatpush1.xpose.msra.mxu0 0.0
    %295 = vmatprep.subr.mxu0 0.0
    %296 = vmatpush1.xpose.msra.mxu0 0.0
    %297 = vmatprep.subr.mxu0 0.0
    %298 = vmatpush1.xpose.msra.mxu0 0.0
    %299 = vmatprep.subr.mxu0 0.0
    %300 = vmatpush1.xpose.msra.mxu0 0.0
    %301 = vmatprep.subr.mxu0 0.0
    %302 = vmatpush1.xpose.msra.mxu0 0.0
    %303 = vmatprep.subr.mxu0 0.0
    %304 = vmatpush1.xpose.msra.mxu0 0.0
    %305 = vmatprep.subr.mxu0 0.0
    %306 = vmatpush1.xpose.msra.mxu0 0.0
    %307 = vmatprep.subr.mxu0 0.0
    %308 = vmatpush1.xpose.msra.mxu0 0.0
    %309 = vmatprep.subr.mxu0 0.0
    %310 = vmatpush1.xpose.msra.mxu0 0.0
    %311 = vmatprep.subr.mxu0 0.0
    %312 = vmatpush1.xpose.msra.mxu0 0.0
    %313 = vmatprep.subr.mxu0 0.0
    %314 = vmatpush1.xpose.msra.mxu0 0.0
    %315 = vmatprep.mubr.f32.mxu0 0.0
    %v316 = vand.u32 %v143, 4294901760
    %317 = vmatmul.mubr.f32.gmra.mrb[0].mxu0 %v316
    %v318 = vpop.f32.mrb[0].mxu0
    %v319 = vadd.f32 %v228, %v318
    %v320 = vpop.f32.mrb[0].mxu0
    %321 = vmatprep.mubr.f32.mxu0 0.0
    %v322 = vand.u32 %v146, 4294901760
    %323 = vmatmul.mubr.f32.gmra.mrb[0].mxu0 %v322
    %v324 = vpop.f32.mrb[0].mxu0
    %v325 = vadd.f32 %v238, %v324
    %v326 = vpop.f32.mrb[0].mxu0
    %327 = vdwg.mxu0
    %328 = vmatprep.subr.mxu0 0.0
    %v329 = vand.u32 %v149, 4294901760
    %v330 = vsub.f32 %v149, %v329
    %331 = vmatpush1.xpose.msra.mxu0 %v330
    %332 = vmatprep.subr.mxu0 0.0
    %v333 = vand.u32 %v152, 4294901760
    %v334 = vsub.f32 %v152, %v333
    %335 = vmatpush1.xpose.msra.mxu0 %v334
    %336 = vmatprep.subr.mxu0 0.0
    %337 = vmatpush1.xpose.msra.mxu0 0.0
    %338 = vmatprep.subr.mxu0 0.0
    %339 = vmatpush1.xpose.msra.mxu0 0.0
    %340 = vmatprep.subr.mxu0 0.0
    %341 = vmatpush1.xpose.msra.mxu0 0.0
    %342 = vmatprep.subr.mxu0 0.0
    %343 = vmatpush1.xpose.msra.mxu0 0.0
    %344 = vmatprep.subr.mxu0 0.0
    %345 = vmatpush1.xpose.msra.mxu0 0.0
    %346 = vmatprep.subr.mxu0 0.0
    %347 = vmatpush1.xpose.msra.mxu0 0.0
    %348 = vmatprep.subr.mxu0 0.0
    %349 = vmatpush1.xpose.msra.mxu0 0.0
    %350 = vmatprep.subr.mxu0 0.0
    %351 = vmatpush1.xpose.msra.mxu0 0.0
    %352 = vmatprep.subr.mxu0 0.0
    %353 = vmatpush1.xpose.msra.mxu0 0.0
    %354 = vmatprep.subr.mxu0 0.0
    %355 = vmatpush1.xpose.msra.mxu0 0.0
    %356 = vmatprep.subr.mxu0 0.0
    %357 = vmatpush1.xpose.msra.mxu0 0.0
    %358 = vmatprep.subr.mxu0 0.0
    %359 = vmatpush1.xpose.msra.mxu0 0.0
    %360 = vmatprep.subr.mxu0 0.0
    %361 = vmatpush1.xpose.msra.mxu0 0.0
    %362 = vmatprep.subr.mxu0 0.0
    %363 = vmatpush1.xpose.msra.mxu0 0.0
    %364 = vmatprep.subr.mxu0 0.0
    %365 = vmatpush1.xpose.msra.mxu0 0.0
    %366 = vmatprep.subr.mxu0 0.0
    %367 = vmatpush1.xpose.msra.mxu0 0.0
    %368 = vmatprep.subr.mxu0 0.0
    %369 = vmatpush1.xpose.msra.mxu0 0.0
    %370 = vmatprep.subr.mxu0 0.0
    %371 = vmatpush1.xpose.msra.mxu0 0.0
    %372 = vmatprep.subr.mxu0 0.0
    %373 = vmatpush1.xpose.msra.mxu0 0.0
    %374 = vmatprep.subr.mxu0 0.0
    %375 = vmatpush1.xpose.msra.mxu0 0.0
    %376 = vmatprep.subr.mxu0 0.0
    %377 = vmatpush1.xpose.msra.mxu0 0.0
    %378 = vmatprep.subr.mxu0 0.0
    %379 = vmatpush1.xpose.msra.mxu0 0.0
    %380 = vmatprep.subr.mxu0 0.0
    %381 = vmatpush1.xpose.msra.mxu0 0.0
    %382 = vmatprep.subr.mxu0 0.0
    %383 = vmatpush1.xpose.msra.mxu0 0.0
    %384 = vmatprep.subr.mxu0 0.0
    %385 = vmatpush1.xpose.msra.mxu0 0.0
    %386 = vmatprep.subr.mxu0 0.0
    %387 = vmatpush1.xpose.msra.mxu0 0.0
    %388 = vmatprep.subr.mxu0 0.0
    %389 = vmatpush1.xpose.msra.mxu0 0.0
    %390 = vmatprep.subr.mxu0 0.0
    %391 = vmatpush1.xpose.msra.mxu0 0.0
    %392 = vmatprep.subr.mxu0 0.0
    %393 = vmatpush1.xpose.msra.mxu0 0.0
    %394 = vmatprep.subr.mxu0 0.0
    %395 = vmatpush1.xpose.msra.mxu0 0.0
    %396 = vmatprep.mubr.f32.mxu0 0.0
    %v397 = vand.u32 %v143, 4294901760
    %v398 = vsub.f32 %v143, %v397
    %399 = vmatmul.mubr.f32.gmra.mrb[0].mxu0 %v398
    %v400 = vpop.f32.mrb[0].mxu0
    %v401 = vadd.f32 %v319, %v400
    %v402 = vpop.f32.mrb[0].mxu0
    %403 = vmatprep.mubr.f32.mxu0 0.0
    %v404 = vand.u32 %v146, 4294901760
    %v405 = vsub.f32 %v146, %v404
    %406 = vmatmul.mubr.f32.gmra.mrb[0].mxu0 %v405
    %v407 = vpop.f32.mrb[0].mxu0
    %v408 = vadd.f32 %v325, %v407
    %v409 = vpop.f32.mrb[0].mxu0
    %410 = vdwg.mxu0
    %411 = vmatprep.subr.mxu0 0.0
    %v412 = vand.u32 %v149, 4294901760
    %413 = vmatpush1.xpose.msra.mxu0 %v412
    %414 = vmatprep.subr.mxu0 0.0
    %v415 = vand.u32 %v152, 4294901760
    %416 = vmatpush1.xpose.msra.mxu0 %v415
    %417 = vmatprep.subr.mxu0 0.0
    %418 = vmatpush1.xpose.msra.mxu0 0.0
    %419 = vmatprep.subr.mxu0 0.0
    %420 = vmatpush1.xpose.msra.mxu0 0.0
    %421 = vmatprep.subr.mxu0 0.0
    %422 = vmatpush1.xpose.msra.mxu0 0.0
    %423 = vmatprep.subr.mxu0 0.0
    %424 = vmatpush1.xpose.msra.mxu0 0.0
    %425 = vmatprep.subr.mxu0 0.0
    %426 = vmatpush1.xpose.msra.mxu0 0.0
    %427 = vmatprep.subr.mxu0 0.0
    %428 = vmatpush1.xpose.msra.mxu0 0.0
    %429 = vmatprep.subr.mxu0 0.0
    %430 = vmatpush1.xpose.msra.mxu0 0.0
    %431 = vmatprep.subr.mxu0 0.0
    %432 = vmatpush1.xpose.msra.mxu0 0.0
    %433 = vmatprep.subr.mxu0 0.0
    %434 = vmatpush1.xpose.msra.mxu0 0.0
    %435 = vmatprep.subr.mxu0 0.0
    %436 = vmatpush1.xpose.msra.mxu0 0.0
    %437 = vmatprep.subr.mxu0 0.0
    %438 = vmatpush1.xpose.msra.mxu0 0.0
    %439 = vmatprep.subr.mxu0 0.0
    %440 = vmatpush1.xpose.msra.mxu0 0.0
    %441 = vmatprep.subr.mxu0 0.0
    %442 = vmatpush1.xpose.msra.mxu0 0.0
    %443 = vmatprep.subr.mxu0 0.0
    %444 = vmatpush1.xpose.msra.mxu0 0.0
    %445 = vmatprep.subr.mxu0 0.0
    %446 = vmatpush1.xpose.msra.mxu0 0.0
    %447 = vmatprep.subr.mxu0 0.0
    %448 = vmatpush1.xpose.msra.mxu0 0.0
    %449 = vmatprep.subr.mxu0 0.0
    %450 = vmatpush1.xpose.msra.mxu0 0.0
    %451 = vmatprep.subr.mxu0 0.0
    %452 = vmatpush1.xpose.msra.mxu0 0.0
    %453 = vmatprep.subr.mxu0 0.0
    %454 = vmatpush1.xpose.msra.mxu0 0.0
    %455 = vmatprep.subr.mxu0 0.0
    %456 = vmatpush1.xpose.msra.mxu0 0.0
    %457 = vmatprep.subr.mxu0 0.0
    %458 = vmatpush1.xpose.msra.mxu0 0.0
    %459 = vmatprep.subr.mxu0 0.0
    %460 = vmatpush1.xpose.msra.mxu0 0.0
    %461 = vmatprep.subr.mxu0 0.0
    %462 = vmatpush1.xpose.msra.mxu0 0.0
    %463 = vmatprep.subr.mxu0 0.0
    %464 = vmatpush1.xpose.msra.mxu0 0.0
    %465 = vmatprep.subr.mxu0 0.0
    %466 = vmatpush1.xpose.msra.mxu0 0.0
    %467 = vmatprep.subr.mxu0 0.0
    %468 = vmatpush1.xpose.msra.mxu0 0.0
    %469 = vmatprep.subr.mxu0 0.0
    %470 = vmatpush1.xpose.msra.mxu0 0.0
    %471 = vmatprep.subr.mxu0 0.0
    %472 = vmatpush1.xpose.msra.mxu0 0.0
    %473 = vmatprep.subr.mxu0 0.0
    %474 = vmatpush1.xpose.msra.mxu0 0.0
    %475 = vmatprep.subr.mxu0 0.0
    %476 = vmatpush1.xpose.msra.mxu0 0.0
    %477 = vmatprep.mubr.f32.mxu0 0.0
    %v478 = vand.u32 %v143, 4294901760
    %v479 = vsub.f32 %v143, %v478
    %v480 = vand.u32 %v479, 4294901760
    %481 = vmatmul.mubr.f32.gmra.mrb[0].mxu0 %v480
    %v482 = vpop.f32.mrb[0].mxu0
    %v483 = vadd.f32 %v401, %v482
    %v484 = vpop.f32.mrb[0].mxu0
    %485 = vmatprep.mubr.f32.mxu0 0.0
    %v486 = vand.u32 %v146, 4294901760
    %v487 = vsub.f32 %v146, %v486
    %v488 = vand.u32 %v487, 4294901760
    %489 = vmatmul.mubr.f32.gmra.mrb[0].mxu0 %v488
    %v490 = vpop.f32.mrb[0].mxu0
    %v491 = vadd.f32 %v408, %v490
    %v492 = vpop.f32.mrb[0].mxu0
    %493 = vdwg.mxu0
    %494 = vmatprep.subr.mxu0 0.0
    %v495 = vand.u32 %v149, 4294901760
    %v496 = vsub.f32 %v149, %v495
    %v497 = vand.u32 %v496, 4294901760
    %498 = vmatpush1.xpose.msra.mxu0 %v497
    %499 = vmatprep.subr.mxu0 0.0
    %v500 = vand.u32 %v152, 4294901760
    %v501 = vsub.f32 %v152, %v500
    %v502 = vand.u32 %v501, 4294901760
    %503 = vmatpush1.xpose.msra.mxu0 %v502
    %504 = vmatprep.subr.mxu0 0.0
    %505 = vmatpush1.xpose.msra.mxu0 0.0
    %506 = vmatprep.subr.mxu0 0.0
    %507 = vmatpush1.xpose.msra.mxu0 0.0
    %508 = vmatprep.subr.mxu0 0.0
    %509 = vmatpush1.xpose.msra.mxu0 0.0
    %510 = vmatprep.subr.mxu0 0.0
    %511 = vmatpush1.xpose.msra.mxu0 0.0
    %512 = vmatprep.subr.mxu0 0.0
    %513 = vmatpush1.xpose.msra.mxu0 0.0
    %514 = vmatprep.subr.mxu0 0.0
    %515 = vmatpush1.xpose.msra.mxu0 0.0
    %516 = vmatprep.subr.mxu0 0.0
    %517 = vmatpush1.xpose.msra.mxu0 0.0
    %518 = vmatprep.subr.mxu0 0.0
    %519 = vmatpush1.xpose.msra.mxu0 0.0
    %520 = vmatprep.subr.mxu0 0.0
    %521 = vmatpush1.xpose.msra.mxu0 0.0
    %522 = vmatprep.subr.mxu0 0.0
    %523 = vmatpush1.xpose.msra.mxu0 0.0
    %524 = vmatprep.subr.mxu0 0.0
    %525 = vmatpush1.xpose.msra.mxu0 0.0
    %526 = vmatprep.subr.mxu0 0.0
    %527 = vmatpush1.xpose.msra.mxu0 0.0
    %528 = vmatprep.subr.mxu0 0.0
    %529 = vmatpush1.xpose.msra.mxu0 0.0
    %530 = vmatprep.subr.mxu0 0.0
    %531 = vmatpush1.xpose.msra.mxu0 0.0
    %532 = vmatprep.subr.mxu0 0.0
    %533 = vmatpush1.xpose.msra.mxu0 0.0
    %534 = vmatprep.subr.mxu0 0.0
    %535 = vmatpush1.xpose.msra.mxu0 0.0
    %536 = vmatprep.subr.mxu0 0.0
    %537 = vmatpush1.xpose.msra.mxu0 0.0
    %538 = vmatprep.subr.mxu0 0.0
    %539 = vmatpush1.xpose.msra.mxu0 0.0
    %540 = vmatprep.subr.mxu0 0.0
    %541 = vmatpush1.xpose.msra.mxu0 0.0
    %542 = vmatprep.subr.mxu0 0.0
    %543 = vmatpush1.xpose.msra.mxu0 0.0
    %544 = vmatprep.subr.mxu0 0.0
    %545 = vmatpush1.xpose.msra.mxu0 0.0
    %546 = vmatprep.subr.mxu0 0.0
    %547 = vmatpush1.xpose.msra.mxu0 0.0
    %548 = vmatprep.subr.mxu0 0.0
    %549 = vmatpush1.xpose.msra.mxu0 0.0
    %550 = vmatprep.subr.mxu0 0.0
    %551 = vmatpush1.xpose.msra.mxu0 0.0
    %552 = vmatprep.subr.mxu0 0.0
    %553 = vmatpush1.xpose.msra.mxu0 0.0
    %554 = vmatprep.subr.mxu0 0.0
    %555 = vmatpush1.xpose.msra.mxu0 0.0
    %556 = vmatprep.subr.mxu0 0.0
    %557 = vmatpush1.xpose.msra.mxu0 0.0
    %558 = vmatprep.subr.mxu0 0.0
    %559 = vmatpush1.xpose.msra.mxu0 0.0
    %560 = vmatprep.subr.mxu0 0.0
    %561 = vmatpush1.xpose.msra.mxu0 0.0
    %562 = vmatprep.subr.mxu0 0.0
    %563 = vmatpush1.xpose.msra.mxu0 0.0
    %564 = vmatprep.mubr.f32.mxu0 0.0
    %v565 = vand.u32 %v143, 4294901760
    %566 = vmatmul.mubr.f32.gmra.mrb[0].mxu0 %v565
    %v567 = vpop.f32.mrb[0].mxu0
    %v568 = vadd.f32 %v483, %v567
    %v569 = vpop.f32.mrb[0].mxu0
    %570 = vmatprep.mubr.f32.mxu0 0.0
    %v571 = vand.u32 %v146, 4294901760
    %572 = vmatmul.mubr.f32.gmra.mrb[0].mxu0 %v571
    %v573 = vpop.f32.mrb[0].mxu0
    %v574 = vadd.f32 %v491, %v573
    %v575 = vpop.f32.mrb[0].mxu0
    %576 = vdwg.mxu0
    %577 = vmatprep.subr.mxu0 0.0
    %v578 = vand.u32 %v149, 4294901760
    %579 = vmatpush1.xpose.msra.mxu0 %v578
    %580 = vmatprep.subr.mxu0 0.0
    %v581 = vand.u32 %v152, 4294901760
    %582 = vmatpush1.xpose.msra.mxu0 %v581
    %583 = vmatprep.subr.mxu0 0.0
    %584 = vmatpush1.xpose.msra.mxu0 0.0
    %585 = vmatprep.subr.mxu0 0.0
    %586 = vmatpush1.xpose.msra.mxu0 0.0
    %587 = vmatprep.subr.mxu0 0.0
    %588 = vmatpush1.xpose.msra.mxu0 0.0
    %589 = vmatprep.subr.mxu0 0.0
    %590 = vmatpush1.xpose.msra.mxu0 0.0
    %591 = vmatprep.subr.mxu0 0.0
    %592 = vmatpush1.xpose.msra.mxu0 0.0
    %593 = vmatprep.subr.mxu0 0.0
    %594 = vmatpush1.xpose.msra.mxu0 0.0
    %595 = vmatprep.subr.mxu0 0.0
    %596 = vmatpush1.xpose.msra.mxu0 0.0
    %597 = vmatprep.subr.mxu0 0.0
    %598 = vmatpush1.xpose.msra.mxu0 0.0
    %599 = vmatprep.subr.mxu0 0.0
    %600 = vmatpush1.xpose.msra.mxu0 0.0
    %601 = vmatprep.subr.mxu0 0.0
    %602 = vmatpush1.xpose.msra.mxu0 0.0
    %603 = vmatprep.subr.mxu0 0.0
    %604 = vmatpush1.xpose.msra.mxu0 0.0
    %605 = vmatprep.subr.mxu0 0.0
    %606 = vmatpush1.xpose.msra.mxu0 0.0
    %607 = vmatprep.subr.mxu0 0.0
    %608 = vmatpush1.xpose.msra.mxu0 0.0
    %609 = vmatprep.subr.mxu0 0.0
    %610 = vmatpush1.xpose.msra.mxu0 0.0
    %611 = vmatprep.subr.mxu0 0.0
    %612 = vmatpush1.xpose.msra.mxu0 0.0
    %613 = vmatprep.subr.mxu0 0.0
    %614 = vmatpush1.xpose.msra.mxu0 0.0
    %615 = vmatprep.subr.mxu0 0.0
    %616 = vmatpush1.xpose.msra.mxu0 0.0
    %617 = vmatprep.subr.mxu0 0.0
    %618 = vmatpush1.xpose.msra.mxu0 0.0
    %619 = vmatprep.subr.mxu0 0.0
    %620 = vmatpush1.xpose.msra.mxu0 0.0
    %621 = vmatprep.subr.mxu0 0.0
    %622 = vmatpush1.xpose.msra.mxu0 0.0
    %623 = vmatprep.subr.mxu0 0.0
    %624 = vmatpush1.xpose.msra.mxu0 0.0
    %625 = vmatprep.subr.mxu0 0.0
    %626 = vmatpush1.xpose.msra.mxu0 0.0
    %627 = vmatprep.subr.mxu0 0.0
    %628 = vmatpush1.xpose.msra.mxu0 0.0
    %629 = vmatprep.subr.mxu0 0.0
    %630 = vmatpush1.xpose.msra.mxu0 0.0
    %631 = vmatprep.subr.mxu0 0.0
    %632 = vmatpush1.xpose.msra.mxu0 0.0
    %633 = vmatprep.subr.mxu0 0.0
    %634 = vmatpush1.xpose.msra.mxu0 0.0
    %635 = vmatprep.subr.mxu0 0.0
    %636 = vmatpush1.xpose.msra.mxu0 0.0
    %637 = vmatprep.subr.mxu0 0.0
    %638 = vmatpush1.xpose.msra.mxu0 0.0
    %639 = vmatprep.subr.mxu0 0.0
    %640 = vmatpush1.xpose.msra.mxu0 0.0
    %641 = vmatprep.subr.mxu0 0.0
    %642 = vmatpush1.xpose.msra.mxu0 0.0
    %643 = vmatprep.mubr.f32.mxu0 0.0
    %v644 = vand.u32 %v143, 4294901760
    %645 = vmatmul.mubr.f32.gmra.mrb[0].mxu0 %v644
    %v646 = vpop.f32.mrb[0].mxu0
    %v647 = vadd.f32 %v568, %v646
    %v648 = vpop.f32.mrb[0].mxu0
    %649 = vmatprep.mubr.f32.mxu0 0.0
    %v650 = vand.u32 %v146, 4294901760
    %651 = vmatmul.mubr.f32.gmra.mrb[0].mxu0 %v650
    %v652 = vpop.f32.mrb[0].mxu0
    %v653 = vadd.f32 %v574, %v652
    %v654 = vpop.f32.mrb[0].mxu0
    %655 = vdwg.mxu0
    %vm656 = vcmask 130048
    %657 = vst.msk [vmem:[#allocation9] sm:$0xff] %vm656, %v647
    %658 = vst.msk [vmem:[#allocation9 + $0x8] sm:$0xff] %vm656, %v653
    // Predicated region
    $region26: #{tpu_custom_call.1} parent=1 // pred_check
      _
    $region27: #{tpu_custom_call.1} parent=1 // pred_check_branch
      %660 = sbr.rel (0) target = $region29
    $region28: #{tpu_custom_call.1} parent=1 // pred_region
      %s662 = ssub.s32 256, 256
      %663 = vsyncadd [#allocation4], %s662
      %s664 = sshll.u32 [#allocation8], 4
      %s665 = int_to_ptr.vmem [resolvable:$true] %s664
      %670 = dma.vmem_to_hbm [thread:$0]  %s665, 256, %s3, [#allocation4], 128, 128, 8
    $region29: #{tpu_custom_call.1} parent=1 // pred_fallthru
      _
    // Predicated region
    $region30: #{tpu_custom_call.1} parent=1 // pred_check
      _
    $region31: #{tpu_custom_call.1} parent=1 // pred_check_branch
      %672 = sbr.rel (0) target = $region33
    $region32: #{tpu_custom_call.1} parent=1 // pred_region
      %s674 = ssub.s32 256, 256
      %675 = vsyncadd [#allocation10], %s674
      %s676 = sshll.u32 [#allocation9], 4
      %s677 = int_to_ptr.vmem [resolvable:$true] %s676
      %682 = dma.vmem_to_hbm [thread:$0]  %s677, 256, %s4, [#allocation10], 128, 128, 8
    $region33: #{tpu_custom_call.1} parent=1 // pred_fallthru
      _
    // Predicated region
    $region34: #{tpu_custom_call.1} parent=1 // pred_check
      _
    $region35: #{tpu_custom_call.1} parent=1 // pred_check_branch
      %684 = sbr.rel (0) target = $region37
    $region36: #{tpu_custom_call.1} parent=1 // pred_region
      %685 = dma.done [#allocation4], 256
    $region37: #{tpu_custom_call.1} parent=1 // pred_fallthru
      _
    // Predicated region
    $region38: #{tpu_custom_call.1} parent=1 // pred_check
      _
    $region39: #{tpu_custom_call.1} parent=1 // pred_check_branch
      %687 = sbr.rel (0) target = $region41
    $region40: #{tpu_custom_call.1} parent=1 // pred_region
      %688 = dma.done [#allocation10], 256
    $region41: #{tpu_custom_call.1} parent=1 // pred_fallthru
      _
    %689 = vsyncpa [#allocation3], 1
    %690 = vsyncpa [#allocation6], 1
    %691 = vsyncpa [#allocation4], 1
    %692 = vsyncpa [#allocation10], 1

</llo_original>
